<compile_context>
chip_gen: v5e
topology: v5e:2x2
jax: 0.10.0
libtpu: 0.0.40
codegen_flags: <defaults>
</compile_context>

<pallas_src>
import functools

import jax
import jax.numpy as jnp
from jax.experimental import pallas as pl
from jax.experimental.pallas import tpu as pltpu

LANE = 128
# Safe on every generation: v7x has 64 MiB physical VMEM per TensorCore
# (stay <= ~48 MiB scoped there); v5e/v6e have 128 MiB. Actual working set at
# the default tiles is < ~8 MiB, so this is pure headroom for larger tiles.
VMEM_LIMIT = 48 * 1024 * 1024


def _round_up(v, m):
    return ((v + m - 1) // m) * m


# ----------------------------------------------------------------------------
# Kernel bodies
# ----------------------------------------------------------------------------
def sage_prologue_kernel(x_ref, wcat_ref, bl_ref, hmsg_ref, sself_ref):
    """One fused 2*H-wide matmul yields both the message term and self term.

    hmsg  = relu(x @ Wl + bl)  (bf16) — what gets mean-aggregated over edges.
    sself = x @ Wax            (f32)  — self part of agg_lin(cat([x, agg])).
    """
    h_pad = hmsg_ref.shape[1]
    pre = jnp.dot(x_ref[...], wcat_ref[...], preferred_element_type=jnp.float32)
    hmsg_ref[...] = jnp.maximum(pre[:, :h_pad] + bl_ref[...],
                                0.0).astype(hmsg_ref.dtype)
    sself_ref[...] = pre[:, h_pad:]


def _accumulate(hk_ref, a_ref, acc_ref):
    """acc += A[i-tile, k-tile] @ H_msg[k-tile]   (f32 accumulation)."""
    @pl.when(pl.program_id(1) == 0)
    def _():
        acc_ref[...] = jnp.zeros_like(acc_ref)

    # int8 edge counts -> bf16 for the MXU (via f32; exact for small counts).
    a_bf16 = a_ref[...].astype(jnp.float32).astype(jnp.bfloat16)
    acc_ref[...] += jnp.dot(a_bf16, hk_ref[...],
                            preferred_element_type=jnp.float32)


def _update_normalize(agg, sself, waa_ref, ba_ref):
    """update: relu(sself + agg @ Waa + ba), then L2 row-normalize."""
    upd = (sself
           + jnp.dot(agg.astype(jnp.bfloat16), waa_ref[...],
                     preferred_element_type=jnp.float32)
           + ba_ref[...])
    upd = jnp.maximum(upd, 0.0)
    ssq = jnp.sum(upd * upd, axis=1, keepdims=True)
    # F.normalize(p=2, dim=1, eps=1e-12): x / max(||x||, eps)
    return upd * jax.lax.rsqrt(jnp.maximum(ssq, 1e-24))


def sage_layer_kernel(hk_ref, a_ref, invdeg_ref, sself_ref, waa_ref, ba_ref,
                      o_ref, acc_ref):
    """One GraphSage layer (not the last one). Output: bf16 [TM, H_pad]."""
    _accumulate(hk_ref, a_ref, acc_ref)

    @pl.when(pl.program_id(1) == pl.num_programs(1) - 1)
    def _():
        tm = acc_ref.shape[0]
        sub = min(tm, 256)          # keep epilogue temporaries vreg-resident
        for c in range(0, tm, sub):
            rows = min(sub, tm - c)
            sl = pl.ds(c, rows)
            agg = acc_ref[sl, :] * invdeg_ref[sl, :]      # exact f32 mean
            emb = _update_normalize(agg, sself_ref[sl, :], waa_ref, ba_ref)
            # outer F.relu is identity (emb >= 0); eval-mode dropout is identity
            o_ref[sl, :] = emb.astype(o_ref.dtype)


def sage_head_kernel(out_dim, hk_ref, a_ref, invdeg_ref, sself_ref, waa_ref,
                     ba_ref, w1_ref, b1_ref, w2_ref, b2_ref, o_ref, acc_ref):
    """Last GraphSage layer fused with lin1->relu->lin2->log_softmax head."""
    _accumulate(hk_ref, a_ref, acc_ref)

    @pl.when(pl.program_id(1) == pl.num_programs(1) - 1)
    def _():
        tm = acc_ref.shape[0]
        sub = min(tm, 256)
        for c in range(0, tm, sub):
            rows = min(sub, tm - c)
            sl = pl.ds(c, rows)
            agg = acc_ref[sl, :] * invdeg_ref[sl, :]      # exact f32 mean
            emb = _update_normalize(agg, sself_ref[sl, :], waa_ref, ba_ref)
            # relu after conv is identity; eval-mode dropout is identity.
            h1 = jnp.maximum(
                jnp.dot(emb.astype(jnp.bfloat16), w1_ref[...],
                        preferred_element_type=jnp.float32) + b1_ref[...], 0.0)
            logits = (jnp.dot(h1.astype(jnp.bfloat16), w2_ref[...],
                              preferred_element_type=jnp.float32) + b2_ref[...])
            # mask lane padding so log_softmax only covers the real classes
            col = jax.lax.broadcasted_iota(jnp.int32, logits.shape, 1)
            logits = jnp.where(col < out_dim, logits, -1e30)
            m = jnp.max(logits, axis=1, keepdims=True)
            z = logits - m
            lse = jnp.log(jnp.sum(jnp.exp(z), axis=1, keepdims=True))
            o_ref[sl, :] = z - lse


# ----------------------------------------------------------------------------
# pallas_call wrappers
# ----------------------------------------------------------------------------
def _prologue_call(x_pad, wcat, bl, tm, n_pad, h_pad):
    f_pad = x_pad.shape[1]
    return pl.pallas_call(
        sage_prologue_kernel,
        out_shape=(jax.ShapeDtypeStruct((n_pad, h_pad), jnp.bfloat16),
                   jax.ShapeDtypeStruct((n_pad, h_pad), jnp.float32)),
        grid=(n_pad // tm,),
        in_specs=[pl.BlockSpec((tm, f_pad), lambda i: (i, 0)),
                  pl.BlockSpec(wcat.shape, lambda i: (0, 0)),
                  pl.BlockSpec(bl.shape, lambda i: (0, 0))],
        out_specs=(pl.BlockSpec((tm, h_pad), lambda i: (i, 0)),
                   pl.BlockSpec((tm, h_pad), lambda i: (i, 0))),
        compiler_params=pltpu.CompilerParams(
            dimension_semantics=("parallel",),
            vmem_limit_bytes=VMEM_LIMIT),
    )(x_pad, wcat, bl)


def _agg_call(kernel, h_msg, a_int8, inv_deg, s_self, weight_args, out_cols,
              out_dtype, tm, tk, n_pad, h_pad):
    grid = (n_pad // tm, n_pad // tk)
    in_specs = [
        pl.BlockSpec((tk, h_pad), lambda i, k: (k, 0)),   # H_msg (message src)
        # TODO(synk): sweep pipeline_mode=pl.Buffered(3) on the A spec if a
        # profile shows exposed DMA at k-tile boundaries.
        pl.BlockSpec((tm, tk), lambda i, k: (i, k)),      # int8 adjacency counts
        pl.BlockSpec((tm, 1), lambda i, k: (i, 0)),       # exact f32 1/deg
        pl.BlockSpec((tm, h_pad), lambda i, k: (i, 0)),   # self term (x @ Wax)
    ] + [pl.BlockSpec(w.shape, lambda i, k: (0, 0)) for w in weight_args]
    return pl.pallas_call(
        kernel,
        out_shape=jax.ShapeDtypeStruct((n_pad, out_cols), out_dtype),
        grid=grid,
        in_specs=in_specs,
        out_specs=pl.BlockSpec((tm, out_cols), lambda i, k: (i, 0)),
        scratch_shapes=[pltpu.VMEM((tm, h_pad), jnp.float32)],
        compiler_params=pltpu.CompilerParams(
            dimension_semantics=("parallel", "arbitrary"),
            vmem_limit_bytes=VMEM_LIMIT),
    )(h_msg, a_int8, inv_deg, s_self, *weight_args)


def traffic_sage_net(x, edge_index, params, *, tm=512, tk=4096):
    """Full TrafficSageNet forward (eval mode). Returns [N, output_dim] f32."""
    n, fin = x.shape
    hidden = params["convs"][0]["wl"].shape[1]
    out_dim = params["w2"].shape[1]

    # --- tile sizes: N_pad is a multiple of TM; TK is the largest multiple of
    #     TM that divides N_pad and does not exceed the requested tk ---
    n8 = _round_up(n, 8)
    tm = min(tm, n8)
    n_pad = _round_up(n8, tm)
    blocks = n_pad // tm
    per = 1
    for d in range(1, blocks + 1):
        if blocks % d == 0 and d * tm <= max(tk, tm):
            per = d
    tk = per * tm

    f_pad = _round_up(fin, LANE)
    h_pad = _round_up(hidden, LANE)
    o_pad = _round_up(out_dim, LANE)

    # --- padded / quantized inputs ---
    x_pad = jnp.zeros((n_pad, f_pad), jnp.bfloat16)
    x_pad = x_pad.at[:n, :fin].set(x.astype(jnp.bfloat16))
    a_int8, inv_deg = build_adjacency(edge_index, n, n_pad)
    packed = pack_params(params, f_pad, h_pad, o_pad)

    h = x_pad
    num_layers = len(packed["convs"])
    out = None
    for l, layer in enumerate(packed["convs"]):
        h_msg, s_self = _prologue_call(h, layer["wcat"], layer["bl"],
                                       tm, n_pad, h_pad)
        if l < num_layers - 1:
            h = _agg_call(sage_layer_kernel, h_msg, a_int8, inv_deg, s_self,
                          [layer["waa"], layer["ba"]],
                          h_pad, jnp.bfloat16, tm, tk, n_pad, h_pad)
        else:
            w_args = [layer["waa"], layer["ba"],
                      packed["w1"], packed["b1"], packed["w2"], packed["b2"]]
            out = _agg_call(functools.partial(sage_head_kernel, out_dim),
                            h_msg, a_int8, inv_deg, s_self, w_args,
                            o_pad, jnp.float32, tm, tk, n_pad, h_pad)
    return out[:n, :out_dim]


# ----------------------------------------------------------------------------
# Glue: adjacency counts + inverse degree, parameter packing / init, reference
# ----------------------------------------------------------------------------
def build_adjacency(edge_index, num_nodes, n_pad):
    """int8 edge-multiplicity counts A[i,j] (edge j->i) + exact f32 1/deg rows.

    (A_count @ H) * (1/deg) == mean over incoming messages — same math as
    PyG 'mean' aggregation (duplicate edges counted with multiplicity).
    """
    del num_nodes  # padded rows/cols stay zero and never influence real nodes
    src = edge_index[0]
    dst = edge_index[1]
    counts = jnp.zeros((n_pad, n_pad), jnp.int32)
    counts = counts.at[dst, src].add(1)
    deg = jnp.sum(counts, axis=1, keepdims=True).astype(jnp.float32)
    inv_deg = 1.0 / jnp.maximum(deg, 1.0)
    # NOTE: per-pair edge multiplicity > 127 would overflow int8 (pathological).
    return counts.astype(jnp.int8), inv_deg


def _pad_f32(w, rows, cols):
    out = jnp.zeros((rows, cols), jnp.float32)
    return out.at[:w.shape[0], :w.shape[1]].set(w)


def pack_params(params, f_pad, h_pad, o_pad):
    """Zero-pad weights to lane-dense shapes; fuse Wl||Wax; MXU weights -> bf16."""
    convs = []
    for l, layer in enumerate(params["convs"]):
        fin_pad = f_pad if l == 0 else h_pad
        wl = _pad_f32(layer["wl"], fin_pad, h_pad)
        wax = _pad_f32(layer["wax"], fin_pad, h_pad)
        convs.append({
            "wcat": jnp.concatenate([wl, wax], axis=1).astype(jnp.bfloat16),
            "bl": _pad_f32(layer["bl"], 1, h_pad),
            "waa": _pad_f32(layer["waa"], h_pad, h_pad).astype(jnp.bfloat16),
            "ba": _pad_f32(layer["ba"], 1, h_pad),
        })
    return {
        "convs": convs,
        "w1": _pad_f32(params["w1"], h_pad, h_pad).astype(jnp.bfloat16),
        "b1": _pad_f32(params["b1"], 1, h_pad),
        "w2": _pad_f32(params["w2"], h_pad, o_pad).astype(jnp.bfloat16),
        "b2": _pad_f32(params["b2"], 1, o_pad),
    }


def init_linear(key, fan_in, fan_out):
    """PyTorch nn.Linear default init; returns W^T ([in,out]) and bias [1,out]."""
    kw, kb = jax.random.split(key)
    bound = 1.0 / jnp.sqrt(float(fan_in))
    w = jax.random.uniform(kw, (fan_in, fan_out), jnp.float32, -bound, bound)
    b = jax.random.uniform(kb, (1, fan_out), jnp.float32, -bound, bound)
    return w, b


def init_params(key, num_layers, input_dim, hidden_dim, output_dim):
    keys = jax.random.split(key, 2 * num_layers + 2)
    convs = []
    in_dim = input_dim
    for l in range(num_layers):
        wl, bl = init_linear(keys[2 * l], in_dim, hidden_dim)
        # agg_lin: Linear(in_dim + hidden_dim, hidden_dim); split along cat axis
        wa, ba = init_linear(keys[2 * l + 1], in_dim + hidden_dim, hidden_dim)
        convs.append({
            "wl": wl, "bl": bl,
            "wax": wa[:in_dim, :], "waa": wa[in_dim:, :], "ba": ba,
        })
        in_dim = hidden_dim
    w1, b1 = init_linear(keys[-2], hidden_dim, hidden_dim)
    w2, b2 = init_linear(keys[-1], hidden_dim, output_dim)
    return {"convs": convs, "w1": w1, "b1": b1, "w2": w2, "b2": b2}


def reference_forward(x, edge_index, params):
    """Pure-JAX f32 reference matching the PyTorch module in eval mode."""
    n = x.shape[0]
    src, dst = edge_index[0], edge_index[1]
    a = jnp.zeros((n, n), jnp.float32).at[dst, src].add(1.0)
    deg = jnp.sum(a, axis=1, keepdims=True)
    a_mean = a / jnp.maximum(deg, 1.0)
    h = x
    for layer in params["convs"]:
        msg = jnp.maximum(h @ layer["wl"] + layer["bl"], 0.0)
        agg = a_mean @ msg
        upd = jnp.maximum(h @ layer["wax"] + agg @ layer["waa"] + layer["ba"],
                          0.0)
        norm = jnp.sqrt(jnp.sum(upd * upd, axis=1, keepdims=True))
        h = upd / jnp.maximum(norm, 1e-12)
        h = jnp.maximum(h, 0.0)   # outer relu (identity); eval dropout identity
    h1 = jnp.maximum(h @ params["w1"] + params["b1"], 0.0)
    logits = h1 @ params["w2"] + params["b2"]
    return jax.nn.log_softmax(logits, axis=1)


# ----------------------------------------------------------------------------
if __name__ == "__main__":
    key = jax.random.PRNGKey(0)
    k_x, k_e, k_p = jax.random.split(key, 3)

    num_nodes = 16
    num_edges = 40
    num_layers = 2
    input_dim, hidden_dim, output_dim = 8, 32, 4

    x = jax.random.normal(k_x, (num_nodes, input_dim), jnp.float32)
    edge_index = jax.random.randint(k_e, (2, num_edges), 0, num_nodes,
                                    dtype=jnp.int32)
    params = init_params(k_p, num_layers, input_dim, hidden_dim, output_dim)

    out = traffic_sage_net(x, edge_index, params)
    out = jax.block_until_ready(out)

    assert out.shape == (num_nodes, output_dim)
    # rows of log_softmax must exp-sum to 1
    assert jnp.allclose(jnp.sum(jnp.exp(out), axis=1), 1.0, atol=1e-4)
    # loose tolerance vs f32 reference (kernel uses bf16 MXU inputs)
    ref = reference_forward(x, edge_index, params)
    err = float(jnp.max(jnp.abs(out - ref)))
    assert err < 1e-1, f"max |out - ref| = {err}"
    print("KERNEL_OK")
</pallas_src>

<mosaic_0001>
module attributes {stable_mosaic.version = 11 : i64} {
  func.func @sage_prologue_kernel(%arg0: i32, %arg1: memref<16x128xbf16, #tpu.memory_space<vmem>>, %arg2: memref<128x256xbf16, #tpu.memory_space<vmem>>, %arg3: memref<1x128xf32, #tpu.memory_space<vmem>>, %arg4: memref<16x128xbf16, #tpu.memory_space<vmem>>, %arg5: memref<16x128xf32, #tpu.memory_space<vmem>>) attributes {dimension_semantics = [#tpu.dimension_semantics<parallel>], iteration_bounds = array<i64: 1>, scalar_prefetch = 0 : i64, scratch_operands = 0 : i64, tpu.core_type = #tpu.core_type<tc>, window_params = [{transform_indices = @transform_0, window_bounds = array<i64: 16, 128>}, {pipeline_mode = #tpu.pipeline_mode<synchronous>, transform_indices = @transform_1, window_bounds = array<i64: 128, 256>}, {pipeline_mode = #tpu.pipeline_mode<synchronous>, transform_indices = @transform_2, window_bounds = array<i64: 1, 128>}, {transform_indices = @transform_3, window_bounds = array<i64: 16, 128>}, {transform_indices = @transform_4, window_bounds = array<i64: 16, 128>}]} {
    %c0 = arith.constant 0 : index
    %c0_0 = arith.constant 0 : index
    %0 = vector.load %arg1[%c0, %c0_0] : memref<16x128xbf16, #tpu.memory_space<vmem>>, vector<16x128xbf16>
    %c0_1 = arith.constant 0 : index
    %c0_2 = arith.constant 0 : index
    %1 = vector.load %arg2[%c0_1, %c0_2] : memref<128x256xbf16, #tpu.memory_space<vmem>>, vector<128x256xbf16>
    %cst = arith.constant dense<0.000000e+00> : vector<16x256xf32>
    %2 = tpu.matmul %0, %1, %cst {dimension_numbers = #tpu.dot_dimension_numbers<[1], [0], [0], [1], [0, 0, 1, 1], [], []>} : vector<16x128xbf16>, vector<128x256xbf16>, vector<16x256xf32> -> vector<16x256xf32>
    %3 = vector.extract_strided_slice %2 {offsets = [0, 0], sizes = [16, 128], strides = [1, 1]} : vector<16x256xf32> to vector<16x128xf32>
    %c0_3 = arith.constant 0 : index
    %c0_4 = arith.constant 0 : index
    %4 = vector.load %arg3[%c0_3, %c0_4] : memref<1x128xf32, #tpu.memory_space<vmem>>, vector<1x128xf32>
    %5 = vector.broadcast %4 : vector<1x128xf32> to vector<16x128xf32>
    %6 = arith.addf %3, %5 : vector<16x128xf32>
    %cst_5 = arith.constant 0.000000e+00 : f32
    %7 = vector.broadcast %cst_5 : f32 to vector<16x128xf32>
    %8 = arith.maximumf %6, %7 : vector<16x128xf32>
    %9 = arith.truncf %8 : vector<16x128xf32> to vector<16x128xbf16>
    %c0_6 = arith.constant 0 : index
    %c0_7 = arith.constant 0 : index
    %10 = vector.load %arg4[%c0_6, %c0_7] : memref<16x128xbf16, #tpu.memory_space<vmem>>, vector<16x128xbf16>
    tpu.vector_store %arg4[%c0_6, %c0_7], %9 {strides = array<i32>} : memref<16x128xbf16, #tpu.memory_space<vmem>>, vector<16x128xbf16>,
    %11 = vector.extract_strided_slice %2 {offsets = [0, 128], sizes = [16, 128], strides = [1, 1]} : vector<16x256xf32> to vector<16x128xf32>
    %c0_8 = arith.constant 0 : index
    %c0_9 = arith.constant 0 : index
    %12 = vector.load %arg5[%c0_8, %c0_9] : memref<16x128xf32, #tpu.memory_space<vmem>>, vector<16x128xf32>
    tpu.vector_store %arg5[%c0_8, %c0_9], %11 {strides = array<i32>} : memref<16x128xf32, #tpu.memory_space<vmem>>, vector<16x128xf32>,
    return
  }
  func.func @transform_0(%arg0: i32) -> (i32, i32) {
    %c0_i32 = arith.constant 0 : i32
    %c0_i32_0 = arith.constant 0 : i32
    return %arg0, %c0_i32 : i32, i32
  }
  func.func @transform_1(%arg0: i32) -> (i32, i32) {
    %c0_i32 = arith.constant 0 : i32
    %c0_i32_0 = arith.constant 0 : i32
    %c0_i32_1 = arith.constant 0 : i32
    return %c0_i32, %c0_i32_0 : i32, i32
  }
  func.func @transform_2(%arg0: i32) -> (i32, i32) {
    %c0_i32 = arith.constant 0 : i32
    %c0_i32_0 = arith.constant 0 : i32
    %c0_i32_1 = arith.constant 0 : i32
    return %c0_i32, %c0_i32_0 : i32, i32
  }
  func.func @transform_3(%arg0: i32) -> (i32, i32) {
    %c0_i32 = arith.constant 0 : i32
    %c0_i32_0 = arith.constant 0 : i32
    return %arg0, %c0_i32 : i32, i32
  }
  func.func @transform_4(%arg0: i32) -> (i32, i32) {
    %c0_i32 = arith.constant 0 : i32
    %c0_i32_0 = arith.constant 0 : i32
    return %arg0, %c0_i32 : i32, i32
  }
}

</mosaic_0001>

<llo_original>
// kernel: tpu_custom_call.1
$region0: #{tpu_custom_call.1}
  #allocation0 [shape = 'u32[]', space=smem, size = 0x4, offset = 0x4, fixed_abs, tag = 'smem constant byte address 0x4 - core index']
  #allocation1 [shape = 'u32[72,128]{1,0:T(1,128)}', space=vmem, size = 0x9000, scoped, tag = 'internal scratch']
  %s0 = inlined_call_operand.hbm [shape: bf16[16,128], index: 0, kind: input, shape index: {}]
  %s1 = inlined_call_operand.hbm [shape: bf16[128,256], index: 1, kind: input, shape index: {}]
  %s2 = inlined_call_operand.vmem [shape: f32[1,128], index: 2, kind: input, shape index: {}]
  %s3 = inlined_call_operand.hbm [shape: bf16[16,128], index: 3, kind: output, shape index: {0}]
  %s4 = inlined_call_operand.hbm [shape: f32[16,128], index: 4, kind: output, shape index: {1}]
  %5 = xla_tuple %s3, %s4
  %s6 = sld [smem:[#allocation0]]
  $region38: #{tpu_custom_call.1} parent=0
    _
  %s8 = ssub.s32 1, %s6
  %s9 = scalar_select 0, %s8, %s6
  $region1: #{tpu_custom_call.1} parent=0
    #allocation2 [shape = 'u8[4096]{0}', space=vmem, size = 0x1000, scoped, tag = 'input window, operand 0, single buffered']
    #allocation3 [shape = 's32[1]{0}', space=sflag, size = 0x4, scoped, tag = 'scoped memory for tpu_custom_call.1']
    #allocation4 [shape = 's32[1]{0}', space=sflag, size = 0x4, scoped, tag = 'scoped memory for tpu_custom_call.1']
    #allocation5 [shape = 'u8[65536]{0}', space=vmem, size = 0x10000, scoped, tag = 'input window, operand 1, single buffered']
    #allocation6 [shape = 's32[1]{0}', space=sflag, size = 0x4, scoped, tag = 'scoped memory for tpu_custom_call.1']
    #allocation7 [shape = 'u8[4096]{0}', space=vmem, size = 0x1000, scoped, tag = 'output window, operand 0, single buffered']
    #allocation8 [shape = 'u8[8192]{0}', space=vmem, size = 0x2000, scoped, tag = 'output window, operand 1, single buffered']
    #allocation9 [shape = 's32[1]{0}', space=sflag, size = 0x4, scoped, tag = 'scoped memory for tpu_custom_call.1']
    %10 = vsyncpa [#allocation3], 0
    %11 = vsyncpa [#allocation6], 0
    %12 = vsyncpa [#allocation4], 0
    %13 = vsyncpa [#allocation9], 0
    // Predicated region
    $region2: #{tpu_custom_call.1} parent=1 // pred_check
      _
    $region3: #{tpu_custom_call.1} parent=1 // pred_check_branch
      %15 = sbr.rel (0) target = $region5
    $region4: #{tpu_custom_call.1} parent=1 // pred_region
      %17 = vsyncadd [#allocation3], 0
      %s18 = sshll.u32 %s0, 4
      %s19 = int_to_ptr.hbm [resolvable:$true] %s18
      %s20 = sshll.u32 [#allocation2], 4
      %s21 = int_to_ptr.vmem [resolvable:$true] %s20
      %26 = dma.hbm_to_vmem [thread:$0]  %s19, 128, %s21, [#allocation3], 64, 64, 4
    $region5: #{tpu_custom_call.1} parent=1 // pred_fallthru
      _
    // Predicated region
    $region6: #{tpu_custom_call.1} parent=1 // pred_check
      _
    $region7: #{tpu_custom_call.1} parent=1 // pred_check_branch
      %28 = sbr.rel (0) target = $region9
    $region8: #{tpu_custom_call.1} parent=1 // pred_region
      %30 = vsyncadd [#allocation6], 0
      %s31 = sshll.u32 %s1, 4
      %s32 = int_to_ptr.hbm [resolvable:$true] %s31
      %s33 = sshll.u32 [#allocation5], 4
      %s34 = int_to_ptr.vmem [resolvable:$true] %s33
      %39 = dma.hbm_to_vmem [thread:$0]  %s32, 2048, %s34, [#allocation6], 128, 128, 8
    $region9: #{tpu_custom_call.1} parent=1 // pred_fallthru
      _
    // Predicated region
    $region10: #{tpu_custom_call.1} parent=1 // pred_check
      _
    $region11: #{tpu_custom_call.1} parent=1 // pred_check_branch
      %41 = sbr.rel (0) target = $region13
    $region12: #{tpu_custom_call.1} parent=1 // pred_region
      _
    $region13: #{tpu_custom_call.1} parent=1 // pred_fallthru
      _
    // Predicated region
    $region14: #{tpu_custom_call.1} parent=1 // pred_check
      _
    $region15: #{tpu_custom_call.1} parent=1 // pred_check_branch
      %43 = sbr.rel (0) target = $region17
    $region16: #{tpu_custom_call.1} parent=1 // pred_region
      %45 = dma.done [#allocation3], 128
    $region17: #{tpu_custom_call.1} parent=1 // pred_fallthru
      _
    // Predicated region
    $region18: #{tpu_custom_call.1} parent=1 // pred_check
      _
    $region19: #{tpu_custom_call.1} parent=1 // pred_check_branch
      %47 = sbr.rel (0) target = $region21
    $region20: #{tpu_custom_call.1} parent=1 // pred_region
      %49 = dma.done [#allocation6], 2048
    $region21: #{tpu_custom_call.1} parent=1 // pred_fallthru
      _
    %v50 = vld [vmem:[#allocation2] sm:$0xf]
    %v51 = vld [vmem:[#allocation2 + $0x4] sm:$0xf]
    %v52 = vld [vmem:[#allocation5] sm:$0xff]
    %v53 = vld [vmem:[#allocation5 + $0x8] sm:$0xff]
    %v54 = vld [vmem:[#allocation5 + $0x10] sm:$0xff]
    %v55 = vld [vmem:[#allocation5 + $0x18] sm:$0xff]
    %v56 = vld [vmem:[#allocation5 + $0x20] sm:$0xff]
    %v57 = vld [vmem:[#allocation5 + $0x28] sm:$0xff]
    %v58 = vld [vmem:[#allocation5 + $0x30] sm:$0xff]
    %v59 = vld [vmem:[#allocation5 + $0x38] sm:$0xff]
    %v60 = vld [vmem:[#allocation5 + $0x40] sm:$0xff]
    %v61 = vld [vmem:[#allocation5 + $0x48] sm:$0xff]
    %v62 = vld [vmem:[#allocation5 + $0x50] sm:$0xff]
    %v63 = vld [vmem:[#allocation5 + $0x58] sm:$0xff]
    %v64 = vld [vmem:[#allocation5 + $0x60] sm:$0xff]
    %v65 = vld [vmem:[#allocation5 + $0x68] sm:$0xff]
    %v66 = vld [vmem:[#allocation5 + $0x70] sm:$0xff]
    %v67 = vld [vmem:[#allocation5 + $0x78] sm:$0xff]
    %v70 = vunpack.c.l.b16 %v50
    %v71 = vunpack.c.l.b16 %v51
    %v72 = vpack.c.b16 %v71, %v70
    %v90 = vunpack.c.l.b16 %v52
    %v91 = vunpack.c.h.b16 %v52
    %v92 = vunpack.c.l.b16 %v53
    %v93 = vunpack.c.h.b16 %v53
    %v94 = vunpack.c.l.b16 %v54
    %v95 = vunpack.c.h.b16 %v54
    %v96 = vunpack.c.l.b16 %v55
    %v97 = vunpack.c.h.b16 %v55
    %v98 = vunpack.c.l.b16 %v56
    %v99 = vunpack.c.h.b16 %v56
    %v100 = vunpack.c.l.b16 %v57
    %v101 = vunpack.c.h.b16 %v57
    %v102 = vunpack.c.l.b16 %v58
    %v103 = vunpack.c.h.b16 %v58
    %v104 = vunpack.c.l.b16 %v59
    %v105 = vunpack.c.h.b16 %v59
    %v106 = vunpack.c.l.b16 %v60
    %v107 = vunpack.c.h.b16 %v60
    %v108 = vunpack.c.l.b16 %v61
    %v109 = vunpack.c.h.b16 %v61
    %v110 = vunpack.c.l.b16 %v62
    %v111 = vunpack.c.h.b16 %v62
    %v112 = vunpack.c.l.b16 %v63
    %v113 = vunpack.c.h.b16 %v63
    %v114 = vunpack.c.l.b16 %v64
    %v115 = vunpack.c.h.b16 %v64
    %v116 = vunpack.c.l.b16 %v65
    %v117 = vunpack.c.h.b16 %v65
    %v118 = vunpack.c.l.b16 %v66
    %v119 = vunpack.c.h.b16 %v66
    %v120 = vunpack.c.l.b16 %v67
    %v121 = vunpack.c.h.b16 %v67
    %v122 = vpack.c.b16 %v92, %v90
    %v123 = vpack.c.b16 %v93, %v91
    %v124 = vpack.c.b16 %v96, %v94
    %v125 = vpack.c.b16 %v97, %v95
    %v126 = vpack.c.b16 %v100, %v98
    %v127 = vpack.c.b16 %v101, %v99
    %v128 = vpack.c.b16 %v104, %v102
    %v129 = vpack.c.b16 %v105, %v103
    %v130 = vpack.c.b16 %v108, %v106
    %v131 = vpack.c.b16 %v109, %v107
    %v132 = vpack.c.b16 %v112, %v110
    %v133 = vpack.c.b16 %v113, %v111
    %v134 = vpack.c.b16 %v116, %v114
    %v135 = vpack.c.b16 %v117, %v115
    %v136 = vpack.c.b16 %v120, %v118
    %v137 = vpack.c.b16 %v121, %v119
    %154 = vmatpush.bf16.msra.mxu0 %v136
    %155 = vmatpush.bf16.msra.mxu0 %v134
    %156 = vmatpush.bf16.msra.mxu0 %v132
    %157 = vmatpush.bf16.msra.mxu0 %v130
    %158 = vmatpush.bf16.msra.mxu0 %v128
    %159 = vmatpush.bf16.msra.mxu0 %v126
    %160 = vmatpush.bf16.msra.mxu0 %v124
    %161 = vmatpush.bf16.msra.mxu0 %v122
    %162 = vmatmul.bf16.gmra.mxu0 %v72
    %v163 = vpop.f32.mrf.mxu0
    %v164 = vadd.f32 0.0, %v163
    %v165 = vpop.f32.mrf.mxu0
    %v166 = vadd.f32 0.0, %v165
    %167 = vdwg.mxu0
    %168 = vmatpush.bf16.msra.mxu0 %v137
    %169 = vmatpush.bf16.msra.mxu0 %v135
    %170 = vmatpush.bf16.msra.mxu0 %v133
    %171 = vmatpush.bf16.msra.mxu0 %v131
    %172 = vmatpush.bf16.msra.mxu0 %v129
    %173 = vmatpush.bf16.msra.mxu0 %v127
    %174 = vmatpush.bf16.msra.mxu0 %v125
    %175 = vmatpush.bf16.msra.mxu0 %v123
    %176 = vmatmul.bf16.gmra.mxu0 %v72
    %v177 = vpop.f32.mrf.mxu0
    %v178 = vadd.f32 0.0, %v177
    %v179 = vpop.f32.mrf.mxu0
    %v180 = vadd.f32 0.0, %v179
    %181 = vdwg.mxu0
    %v182 = vld [vmem:[%s2] sm:$0x1]
    %v184 = vperm.slane %v182, 0
    %v186 = vadd.f32 %v164, %v184
    %v187 = vadd.f32 %v166, %v184
    %v188 = vmax.f32 %v186, 0.0
    %v189 = vmax.f32 %v187, 0.0
    %v190 = vpack.c.bf16 %v188, %v188
    %v191 = vpack.c.bf16 %v189, %v189
    %192 = vst [vmem:[#allocation7] sm:$0xf] %v190
    %193 = vst [vmem:[#allocation7 + $0x4] sm:$0xf] %v191
    %194 = vst [vmem:[#allocation8] sm:$0xff] %v178
    %195 = vst [vmem:[#allocation8 + $0x8] sm:$0xff] %v180
    // Predicated region
    $region22: #{tpu_custom_call.1} parent=1 // pred_check
      _
    $region23: #{tpu_custom_call.1} parent=1 // pred_check_branch
      %197 = sbr.rel (0) target = $region25
    $region24: #{tpu_custom_call.1} parent=1 // pred_region
      %199 = vsyncadd [#allocation4], 0
      %s200 = sshll.u32 [#allocation7], 4
      %s201 = int_to_ptr.vmem [resolvable:$true] %s200
      %s202 = sshll.u32 %s3, 4
      %s203 = int_to_ptr.hbm [resolvable:$true] %s202
      %208 = dma.vmem_to_hbm [thread:$0]  %s201, 128, %s203, [#allocation4], 64, 64, 4
    $region25: #{tpu_custom_call.1} parent=1 // pred_fallthru
      _
    // Predicated region
    $region26: #{tpu_custom_call.1} parent=1 // pred_check
      _
    $region27: #{tpu_custom_call.1} parent=1 // pred_check_branch
      %210 = sbr.rel (0) target = $region29
    $region28: #{tpu_custom_call.1} parent=1 // pred_region
      %212 = vsyncadd [#allocation9], 0
      %s213 = sshll.u32 [#allocation8], 4
      %s214 = int_to_ptr.vmem [resolvable:$true] %s213
      %s215 = sshll.u32 %s4, 4
      %s216 = int_to_ptr.hbm [resolvable:$true] %s215
      %221 = dma.vmem_to_hbm [thread:$0]  %s214, 256, %s216, [#allocation9], 128, 128, 8
    $region29: #{tpu_custom_call.1} parent=1 // pred_fallthru
      _
    // Predicated region
    $region30: #{tpu_custom_call.1} parent=1 // pred_check
      _
    $region31: #{tpu_custom_call.1} parent=1 // pred_check_branch
      %223 = sbr.rel (0) target = $region33
    $region32: #{tpu_custom_call.1} parent=1 // pred_region
      %225 = dma.done [#allocation4], 128
    $region33: #{tpu_custom_call.1} parent=1 // pred_fallthru
      _
    // Predicated region
    $region34: #{tpu_custom_call.1} parent=1 // pred_check
      _
    $region35: #{tpu_custom_call.1} parent=1 // pred_check_branch
      %227 = sbr.rel (0) target = $region37
    $region36: #{tpu_custom_call.1} parent=1 // pred_region
      %229 = dma.done [#allocation9], 256
    $region37: #{tpu_custom_call.1} parent=1 // pred_fallthru
      _
    %230 = vsyncpa [#allocation3], 1
    %231 = vsyncpa [#allocation6], 1
    %232 = vsyncpa [#allocation4], 1
    %233 = vsyncpa [#allocation9], 1

</llo_original>
